<compile_context>
chip_gen: v7x
topology: tpu7x:2x2x1
jax: 0.10.0
libtpu: 0.0.40
codegen_flags: <defaults>
</compile_context>

<pallas_src>
import functools

import jax
import jax.numpy as jnp
from jax.experimental import pallas as pl
from jax.experimental.pallas import tpu as pltpu


def _round_up(a, b):
    return (a + b - 1) // b * b


def _rbf_tile_kernel(scales_ref, xr_ref, xc_ref, xsqr_ref, xsqc_ref, o_ref, *,
                     n_kernels, use_pow2):
    # scales_ref: SMEM [n_kernels] f32, scales[k] = -1/(bw * mult_k)
    # xr_ref:     VMEM [TM, D]  f32   (row tile of X)
    # xc_ref:     VMEM [TN, D]  f32   (col tile of X)
    # xsqr_ref:   VMEM [TM, 1]  f32   (row squared norms)
    # xsqc_ref:   VMEM [1, TN]  f32   (col squared norms)
    # o_ref:      VMEM [TM, TN] f32
    xr = xr_ref[...]
    xc = xc_ref[...]

    # Gram tile on the MXU: gram[i, j] = <x_i, x_j>
    gram = jnp.einsum("md,nd->mn", xr, xc, preferred_element_type=jnp.float32)

    # Squared L2 distances; all shapes stay 2-D (no rank-changing broadcasts).
    l2 = jnp.maximum(xsqr_ref[...] + xsqc_ref[...] - 2.0 * gram, 0.0)

    mid = n_kernels // 2
    if use_pow2:
        # multipliers are 2**(k - mid) => exp(-l2/(bw*m_k)) = base ** (2**(mid-k))
        base = jnp.exp(l2 * scales_ref[mid])          # scales[mid] == -1/bw
        acc = base
        t = base
        for _ in range(mid):                          # integer powers: ^2, ^4, ...
            t = t * t
            acc = acc + t
        t = base
        for _ in range(n_kernels - 1 - mid):          # fractional: sqrt, sqrt(sqrt), ...
            t = jnp.sqrt(t)
            acc = acc + t
    else:
        # General multipliers: one exp per kernel, scale hoisted to a scalar.
        acc = jnp.zeros_like(l2)
        for k in range(n_kernels):
            acc = acc + jnp.exp(l2 * scales_ref[k])

    o_ref[...] = acc.astype(o_ref.dtype)


def rbf_pallas(x, n_kernels=5, mul_factor=2.0, bandwidth=None, tile=512):
    """x: [N, D] -> [N, N] float32 multi-bandwidth RBF kernel matrix."""
    assert tile % 128 == 0
    x = x.astype(jnp.float32)
    n, d = x.shape

    multipliers = (
        float(mul_factor)
        ** (jnp.arange(n_kernels, dtype=jnp.float32) - n_kernels // 2)
    )

    # Global bandwidth (closed form; includes the zero diagonal like the reference).
    xsq = jnp.sum(x * x, axis=-1, keepdims=True)                   # [N, 1]
    if bandwidth is None:
        col_sum = jnp.sum(x, axis=0)
        l2_total = 2.0 * n * jnp.sum(xsq) - 2.0 * jnp.sum(col_sum * col_sum)
        bw = l2_total / float(n * n - n)
    else:
        bw = jnp.asarray(bandwidth, jnp.float32)

    # Hoisted negative-reciprocal scales (removes all in-kernel divides).
    scales = (-1.0 / (bw * multipliers)).astype(jnp.float32)        # [n_kernels]

    # Pad N so output tiles are lane-dense multiples of 128.
    if n <= tile:
        n_pad = _round_up(max(n, 8), 128)
        tm = tn = n_pad
    else:
        n_pad = _round_up(n, tile)
        tm = tn = tile

    x_p = x if n_pad == n else jnp.pad(x, ((0, n_pad - n), (0, 0)))
    xsq_p = jnp.sum(x_p * x_p, axis=-1, keepdims=True)              # [n_pad, 1]
    xsq_row = xsq_p
    xsq_col = xsq_p.reshape(1, n_pad)

    use_pow2 = float(mul_factor) == 2.0
    kernel = functools.partial(
        _rbf_tile_kernel, n_kernels=n_kernels, use_pow2=use_pow2
    )

    out = pl.pallas_call(
        kernel,
        out_shape=jax.ShapeDtypeStruct((n_pad, n_pad), jnp.float32),
        grid=(n_pad // tm, n_pad // tn),
        in_specs=[
            pl.BlockSpec(memory_space=pltpu.MemorySpace.SMEM),       # scales
            pl.BlockSpec((tm, d), lambda i, j: (i, 0)),              # X row tile
            pl.BlockSpec((tn, d), lambda i, j: (j, 0)),              # X col tile
            pl.BlockSpec((tm, 1), lambda i, j: (i, 0)),              # ||x||^2 rows
            pl.BlockSpec((1, tn), lambda i, j: (0, j)),              # ||x||^2 cols
        ],
        out_specs=pl.BlockSpec((tm, tn), lambda i, j: (i, j)),
        compiler_params=pltpu.CompilerParams(
            dimension_semantics=("parallel", "parallel")
        ),
    )(scales, x_p, x_p, xsq_row, xsq_col)

    return out if n_pad == n else out[:n, :n]


def rbf_reference(x, n_kernels=5, mul_factor=2.0, bandwidth=None):
    """Pure-JAX reference mirroring the PyTorch forward (diff-based cdist)."""
    x = x.astype(jnp.float32)
    mult = (
        float(mul_factor)
        ** (jnp.arange(n_kernels, dtype=jnp.float32) - n_kernels // 2)
    )
    diff = x[:, None, :] - x[None, :, :]
    l2 = jnp.sum(diff * diff, axis=-1)
    n = x.shape[0]
    bw = jnp.sum(l2) / (n * n - n) if bandwidth is None else bandwidth
    return jnp.sum(jnp.exp(-l2[None, ...] / (bw * mult)[:, None, None]), axis=0)


if __name__ == "__main__":
    key = jax.random.PRNGKey(0)
    k1, k2, k3 = jax.random.split(key, 3)

    # Case 1: module-default small shape (N=8, D=32), power-of-2 multipliers.
    x1 = jax.random.normal(k1, (8, 32), dtype=jnp.float32)
    out1 = jax.block_until_ready(rbf_pallas(x1))
    ref1 = rbf_reference(x1)
    assert out1.shape == (8, 8) and out1.dtype == jnp.float32
    assert jnp.allclose(out1, ref1, rtol=1e-4, atol=1e-4), "case1 mismatch"

    # Case 2: multi-tile grid + padding (N=300 -> padded 384, 3x3 tiles of 128).
    x2 = jax.random.normal(k2, (300, 32), dtype=jnp.float32)
    out2 = jax.block_until_ready(rbf_pallas(x2, tile=128))
    ref2 = rbf_reference(x2)
    assert out2.shape == (300, 300)
    assert jnp.allclose(out2, ref2, rtol=1e-4, atol=1e-4), "case2 mismatch"

    # Case 3: non-power-of-two mul_factor exercises the general exp path.
    x3 = jax.random.normal(k3, (64, 32), dtype=jnp.float32)
    out3 = jax.block_until_ready(rbf_pallas(x3, mul_factor=1.7))
    ref3 = rbf_reference(x3, mul_factor=1.7)
    assert jnp.allclose(out3, ref3, rtol=1e-4, atol=1e-4), "case3 mismatch"

    print("KERNEL_OK")
</pallas_src>

<mosaic_0001>
module attributes {stable_mosaic.version = 11 : i64} {
  func.func @_rbf_tile_kernel(%arg0: i32, %arg1: i32, %arg2: memref<5xf32, #tpu.memory_space<smem>>, %arg3: memref<128x32xf32, #tpu.memory_space<vmem>>, %arg4: memref<128x32xf32, #tpu.memory_space<vmem>>, %arg5: memref<128x1xf32, #tpu.memory_space<vmem>>, %arg6: memref<1x128xf32, #tpu.memory_space<vmem>>, %arg7: memref<128x128xf32, #tpu.memory_space<vmem>>) attributes {dimension_semantics = [#tpu.dimension_semantics<parallel>, #tpu.dimension_semantics<parallel>], iteration_bounds = array<i64: 1, 1>, scalar_prefetch = 0 : i64, scratch_operands = 0 : i64, tpu.core_type = #tpu.core_type<tc>, window_params = [{transform_indices = @transform_0, window_bounds = array<i64: 5>}, {transform_indices = @transform_1, window_bounds = array<i64: 128, 32>}, {transform_indices = @transform_2, window_bounds = array<i64: 128, 32>}, {transform_indices = @transform_3, window_bounds = array<i64: 128, 1>}, {transform_indices = @transform_4, window_bounds = array<i64: 1, 128>}, {transform_indices = @transform_5, window_bounds = array<i64: 128, 128>}]} {
    %c0 = arith.constant 0 : index
    %c0_0 = arith.constant 0 : index
    %0 = vector.load %arg3[%c0, %c0_0] : memref<128x32xf32, #tpu.memory_space<vmem>>, vector<128x32xf32>
    %c0_1 = arith.constant 0 : index
    %c0_2 = arith.constant 0 : index
    %1 = vector.load %arg4[%c0_1, %c0_2] : memref<128x32xf32, #tpu.memory_space<vmem>>, vector<128x32xf32>
    "tpu.trace_start"() <{level = 10 : i32, message = "md,nd->mn"}> : () -> ()
    %cst = arith.constant dense<0.000000e+00> : vector<128x128xf32>
    %2 = tpu.matmul %0, %1, %cst {dimension_numbers = #tpu.dot_dimension_numbers<[1], [1], [0], [0], [0, 0, 1, 0], [], []>} : vector<128x32xf32>, vector<128x32xf32>, vector<128x128xf32> -> vector<128x128xf32>
    "tpu.trace_stop"() : () -> ()
    %c0_3 = arith.constant 0 : index
    %c0_4 = arith.constant 0 : index
    %3 = vector.load %arg5[%c0_3, %c0_4] : memref<128x1xf32, #tpu.memory_space<vmem>>, vector<128x1xf32>
    %c0_5 = arith.constant 0 : index
    %c0_6 = arith.constant 0 : index
    %4 = vector.load %arg6[%c0_5, %c0_6] : memref<1x128xf32, #tpu.memory_space<vmem>>, vector<1x128xf32>
    %5 = vector.broadcast %3 : vector<128x1xf32> to vector<128x128xf32>
    %6 = vector.broadcast %4 : vector<1x128xf32> to vector<128x128xf32>
    %7 = arith.addf %5, %6 : vector<128x128xf32>
    %cst_7 = arith.constant 2.000000e+00 : f32
    %8 = vector.broadcast %cst_7 : f32 to vector<128x128xf32>
    %9 = arith.mulf %8, %2 : vector<128x128xf32>
    %10 = arith.subf %7, %9 : vector<128x128xf32>
    %cst_8 = arith.constant 0.000000e+00 : f32
    %11 = vector.broadcast %cst_8 : f32 to vector<128x128xf32>
    %12 = arith.maximumf %10, %11 : vector<128x128xf32>
    %c2 = arith.constant 2 : index
    %13 = memref.load %arg2[%c2] : memref<5xf32, #tpu.memory_space<smem>>
    %14 = vector.broadcast %13 : f32 to vector<128x128xf32>
    %15 = arith.mulf %12, %14 : vector<128x128xf32>
    %16 = math.exp %15 : vector<128x128xf32>
    %17 = arith.mulf %16, %16 : vector<128x128xf32>
    %18 = arith.addf %16, %17 : vector<128x128xf32>
    %19 = arith.mulf %17, %17 : vector<128x128xf32>
    %20 = arith.addf %18, %19 : vector<128x128xf32>
    %21 = math.sqrt %16 : vector<128x128xf32>
    %22 = arith.addf %20, %21 : vector<128x128xf32>
    %23 = math.sqrt %21 : vector<128x128xf32>
    %24 = arith.addf %22, %23 : vector<128x128xf32>
    %c0_9 = arith.constant 0 : index
    %c0_10 = arith.constant 0 : index
    %25 = vector.load %arg7[%c0_9, %c0_10] : memref<128x128xf32, #tpu.memory_space<vmem>>, vector<128x128xf32>
    tpu.vector_store %arg7[%c0_9, %c0_10], %24 {strides = array<i32>} : memref<128x128xf32, #tpu.memory_space<vmem>>, vector<128x128xf32>,
    return
  }
  func.func @transform_0(%arg0: i32, %arg1: i32) -> i32 {
    %c0_i32 = arith.constant 0 : i32
    %c0_i32_0 = arith.constant 0 : i32
    return %c0_i32 : i32
  }
  func.func @transform_1(%arg0: i32, %arg1: i32) -> (i32, i32) {
    %c0_i32 = arith.constant 0 : i32
    %c0_i32_0 = arith.constant 0 : i32
    return %arg0, %c0_i32 : i32, i32
  }
  func.func @transform_2(%arg0: i32, %arg1: i32) -> (i32, i32) {
    %c0_i32 = arith.constant 0 : i32
    %c0_i32_0 = arith.constant 0 : i32
    return %arg1, %c0_i32 : i32, i32
  }
  func.func @transform_3(%arg0: i32, %arg1: i32) -> (i32, i32) {
    %c0_i32 = arith.constant 0 : i32
    %c0_i32_0 = arith.constant 0 : i32
    return %arg0, %c0_i32 : i32, i32
  }
  func.func @transform_4(%arg0: i32, %arg1: i32) -> (i32, i32) {
    %c0_i32 = arith.constant 0 : i32
    %c0_i32_0 = arith.constant 0 : i32
    return %c0_i32, %arg1 : i32, i32
  }
  func.func @transform_5(%arg0: i32, %arg1: i32) -> (i32, i32) {
    %c0_i32 = arith.constant 0 : i32
    return %arg0, %arg1 : i32, i32
  }
}

</mosaic_0001>

<llo_original>
// kernel: tpu_custom_call.1
$region0: #{tpu_custom_call.1}
  #allocation0 [shape = 'u32[]', space=smem, size = 0x4, offset = 0x4, fixed_abs, tag = 'smem constant byte address 0x4 - core index']
  #allocation1 [shape = 'u32[144,128]{1,0:T(1,128)}', space=vmem, size = 0x12000, scoped, tag = 'internal scratch']
  %s0 = inlined_call_operand.vmem [shape: f32[5], index: 0, kind: input, shape index: {}]
  %s1 = inlined_call_operand.vmem [shape: f32[128,32], index: 1, kind: input, shape index: {}]
  %s2 = inlined_call_operand.vmem [shape: f32[128,32], index: 2, kind: input, shape index: {}]
  %s3 = inlined_call_operand.vmem [shape: f32[128,1], index: 3, kind: input, shape index: {}]
  %s4 = inlined_call_operand.vmem [shape: f32[1,128], index: 4, kind: input, shape index: {}]
  %s5 = inlined_call_operand.hbm [shape: f32[128,128], index: 5, kind: output, shape index: {}]
  %s6 = sld [smem:[#allocation0]]
  $region34: #{tpu_custom_call.1} parent=0
    _
  %s8 = ssub.s32 1, %s6
  %s9 = scalar_select 0, %s8, %s6
  $region1: #{tpu_custom_call.1} parent=0
    #allocation2 [shape = 'u8[512]{0}', space=smem, size = 0x200, scoped, tag = 'input window, operand 0, single buffered']
    #allocation3 [shape = 's32[1]{0}', space=sflag, size = 0x4, scoped, tag = 'scoped memory for tpu_custom_call.1']
    #allocation4 [shape = 's32[1]{0}', space=sflag, size = 0x4, scoped, tag = 'scoped memory for tpu_custom_call.1']
    #allocation5 [shape = 'u8[65536]{0}', space=vmem, size = 0x10000, scoped, tag = 'output window, operand 0, single buffered']
    %10 = vsyncpa [#allocation4], 0
    %11 = vsyncpa [#allocation3], 0
    // Predicated region
    $region2: #{tpu_custom_call.1} parent=1 // pred_check
      _
    $region3: #{tpu_custom_call.1} parent=1 // pred_check_branch
      %13 = sbr.rel (0) target = $region5
    $region4: #{tpu_custom_call.1} parent=1 // pred_region
      %s15 = ssub.s32 16, 16
      %16 = vsyncadd [#allocation4], %s15
      %s18 = sshll.u32 %s0, 4
      %s19 = int_to_ptr.vmem [resolvable:$true] %s18
      %21 = dma.vmem_to_smem %s19, 16, [#allocation2], [#allocation4]
    $region5: #{tpu_custom_call.1} parent=1 // pred_fallthru
      _
    // Predicated region
    $region6: #{tpu_custom_call.1} parent=1 // pred_check
      _
    $region7: #{tpu_custom_call.1} parent=1 // pred_check_branch
      %23 = sbr.rel (0) target = $region9
    $region8: #{tpu_custom_call.1} parent=1 // pred_region
      _
    $region9: #{tpu_custom_call.1} parent=1 // pred_fallthru
      _
    // Predicated region
    $region10: #{tpu_custom_call.1} parent=1 // pred_check
      _
    $region11: #{tpu_custom_call.1} parent=1 // pred_check_branch
      %25 = sbr.rel (0) target = $region13
    $region12: #{tpu_custom_call.1} parent=1 // pred_region
      _
    $region13: #{tpu_custom_call.1} parent=1 // pred_fallthru
      _
    // Predicated region
    $region14: #{tpu_custom_call.1} parent=1 // pred_check
      _
    $region15: #{tpu_custom_call.1} parent=1 // pred_check_branch
      %27 = sbr.rel (0) target = $region17
    $region16: #{tpu_custom_call.1} parent=1 // pred_region
      _
    $region17: #{tpu_custom_call.1} parent=1 // pred_fallthru
      _
    // Predicated region
    $region18: #{tpu_custom_call.1} parent=1 // pred_check
      _
    $region19: #{tpu_custom_call.1} parent=1 // pred_check_branch
      %29 = sbr.rel (0) target = $region21
    $region20: #{tpu_custom_call.1} parent=1 // pred_region
      _
    $region21: #{tpu_custom_call.1} parent=1 // pred_fallthru
      _
    // Predicated region
    $region22: #{tpu_custom_call.1} parent=1 // pred_check
      _
    $region23: #{tpu_custom_call.1} parent=1 // pred_check_branch
      %31 = sbr.rel (0) target = $region25
    $region24: #{tpu_custom_call.1} parent=1 // pred_region
      %32 = dma.done [#allocation4], 16
    $region25: #{tpu_custom_call.1} parent=1 // pred_fallthru
      _
    %33 = sfence
    %v34 = vld [vmem:[%s1] sm:$0xff]
    %v35 = vld [vmem:[%s1 + $0x8] sm:$0xff]
    %v36 = vld [vmem:[%s1 + $0x10] sm:$0xff]
    %v37 = vld [vmem:[%s1 + $0x18] sm:$0xff]
    %v38 = vld [vmem:[%s1 + $0x20] sm:$0xff]
    %v39 = vld [vmem:[%s1 + $0x28] sm:$0xff]
    %v40 = vld [vmem:[%s1 + $0x30] sm:$0xff]
    %v41 = vld [vmem:[%s1 + $0x38] sm:$0xff]
    %v42 = vld [vmem:[%s1 + $0x40] sm:$0xff]
    %v43 = vld [vmem:[%s1 + $0x48] sm:$0xff]
    %v44 = vld [vmem:[%s1 + $0x50] sm:$0xff]
    %v45 = vld [vmem:[%s1 + $0x58] sm:$0xff]
    %v46 = vld [vmem:[%s1 + $0x60] sm:$0xff]
    %v47 = vld [vmem:[%s1 + $0x68] sm:$0xff]
    %v48 = vld [vmem:[%s1 + $0x70] sm:$0xff]
    %v49 = vld [vmem:[%s1 + $0x78] sm:$0xff]
    %v50 = vld [vmem:[%s2] sm:$0xff]
    %v51 = vld [vmem:[%s2 + $0x8] sm:$0xff]
    %v52 = vld [vmem:[%s2 + $0x10] sm:$0xff]
    %v53 = vld [vmem:[%s2 + $0x18] sm:$0xff]
    %v54 = vld [vmem:[%s2 + $0x20] sm:$0xff]
    %v55 = vld [vmem:[%s2 + $0x28] sm:$0xff]
    %v56 = vld [vmem:[%s2 + $0x30] sm:$0xff]
    %v57 = vld [vmem:[%s2 + $0x38] sm:$0xff]
    %v58 = vld [vmem:[%s2 + $0x40] sm:$0xff]
    %v59 = vld [vmem:[%s2 + $0x48] sm:$0xff]
    %v60 = vld [vmem:[%s2 + $0x50] sm:$0xff]
    %v61 = vld [vmem:[%s2 + $0x58] sm:$0xff]
    %v62 = vld [vmem:[%s2 + $0x60] sm:$0xff]
    %v63 = vld [vmem:[%s2 + $0x68] sm:$0xff]
    %v64 = vld [vmem:[%s2 + $0x70] sm:$0xff]
    %v65 = vld [vmem:[%s2 + $0x78] sm:$0xff]
    %vm66 = vcmask 261120
    %v68 = vsel %vm66, %v34, 0
    %v71 = vsel %vm66, %v35, 0
    %v74 = vsel %vm66, %v36, 0
    %v77 = vsel %vm66, %v37, 0
    %v80 = vsel %vm66, %v38, 0
    %v83 = vsel %vm66, %v39, 0
    %v86 = vsel %vm66, %v40, 0
    %v89 = vsel %vm66, %v41, 0
    %v92 = vsel %vm66, %v42, 0
    %v95 = vsel %vm66, %v43, 0
    %v98 = vsel %vm66, %v44, 0
    %v101 = vsel %vm66, %v45, 0
    %v104 = vsel %vm66, %v46, 0
    %v107 = vsel %vm66, %v47, 0
    %v110 = vsel %vm66, %v48, 0
    %v113 = vsel %vm66, %v49, 0
    %v116 = vsel %vm66, %v50, 0
    %v119 = vsel %vm66, %v51, 0
    %v122 = vsel %vm66, %v52, 0
    %v125 = vsel %vm66, %v53, 0
    %v128 = vsel %vm66, %v54, 0
    %v131 = vsel %vm66, %v55, 0
    %v134 = vsel %vm66, %v56, 0
    %v137 = vsel %vm66, %v57, 0
    %v140 = vsel %vm66, %v58, 0
    %v143 = vsel %vm66, %v59, 0
    %v146 = vsel %vm66, %v60, 0
    %v149 = vsel %vm66, %v61, 0
    %v152 = vsel %vm66, %v62, 0
    %v155 = vsel %vm66, %v63, 0
    %v158 = vsel %vm66, %v64, 0
    %v161 = vsel %vm66, %v65, 0
    %163 = vmatprep.subr.mxu0 0.0
    %164 = vmatpush1.xpose.msra.mxu0 %v116
    %165 = vmatprep.subr.mxu0 0.0
    %166 = vmatpush1.xpose.msra.mxu0 %v119
    %167 = vmatprep.subr.mxu0 0.0
    %168 = vmatpush1.xpose.msra.mxu0 %v122
    %169 = vmatprep.subr.mxu0 0.0
    %170 = vmatpush1.xpose.msra.mxu0 %v125
    %171 = vmatprep.subr.mxu0 0.0
    %172 = vmatpush1.xpose.msra.mxu0 %v128
    %173 = vmatprep.subr.mxu0 0.0
    %174 = vmatpush1.xpose.msra.mxu0 %v131
    %175 = vmatprep.subr.mxu0 0.0
    %176 = vmatpush1.xpose.msra.mxu0 %v134
    %177 = vmatprep.subr.mxu0 0.0
    %178 = vmatpush1.xpose.msra.mxu0 %v137
    %179 = vmatprep.subr.mxu0 0.0
    %180 = vmatpush1.xpose.msra.mxu0 %v140
    %181 = vmatprep.subr.mxu0 0.0
    %182 = vmatpush1.xpose.msra.mxu0 %v143
    %183 = vmatprep.subr.mxu0 0.0
    %184 = vmatpush1.xpose.msra.mxu0 %v146
    %185 = vmatprep.subr.mxu0 0.0
    %186 = vmatpush1.xpose.msra.mxu0 %v149
    %187 = vmatprep.subr.mxu0 0.0
    %188 = vmatpush1.xpose.msra.mxu0 %v152
    %189 = vmatprep.subr.mxu0 0.0
    %190 = vmatpush1.xpose.msra.mxu0 %v155
    %191 = vmatprep.subr.mxu0 0.0
    %192 = vmatpush1.xpose.msra.mxu0 %v158
    %193 = vmatprep.subr.mxu0 0.0
    %194 = vmatpush1.xpose.msra.mxu0 %v161
    %195 = vmatprep.subr.mxu0 0.0
    %196 = vmatpush1.xpose.msra.mxu0 0.0
    %197 = vmatprep.subr.mxu0 0.0
    %198 = vmatpush1.xpose.msra.mxu0 0.0
    %199 = vmatprep.subr.mxu0 0.0
    %200 = vmatpush1.xpose.msra.mxu0 0.0
    %201 = vmatprep.subr.mxu0 0.0
    %202 = vmatpush1.xpose.msra.mxu0 0.0
    %203 = vmatprep.subr.mxu0 0.0
    %204 = vmatpush1.xpose.msra.mxu0 0.0
    %205 = vmatprep.subr.mxu0 0.0
    %206 = vmatpush1.xpose.msra.mxu0 0.0
    %207 = vmatprep.subr.mxu0 0.0
    %208 = vmatpush1.xpose.msra.mxu0 0.0
    %209 = vmatprep.subr.mxu0 0.0
    %210 = vmatpush1.xpose.msra.mxu0 0.0
    %211 = vmatprep.subr.mxu0 0.0
    %212 = vmatpush1.xpose.msra.mxu0 0.0
    %213 = vmatprep.subr.mxu0 0.0
    %214 = vmatpush1.xpose.msra.mxu0 0.0
    %215 = vmatprep.subr.mxu0 0.0
    %216 = vmatpush1.xpose.msra.mxu0 0.0
    %217 = vmatprep.subr.mxu0 0.0
    %218 = vmatpush1.xpose.msra.mxu0 0.0
    %219 = vmatprep.subr.mxu0 0.0
    %220 = vmatpush1.xpose.msra.mxu0 0.0
    %221 = vmatprep.subr.mxu0 0.0
    %222 = vmatpush1.xpose.msra.mxu0 0.0
    %223 = vmatprep.subr.mxu0 0.0
    %224 = vmatpush1.xpose.msra.mxu0 0.0
    %225 = vmatprep.subr.mxu0 0.0
    %226 = vmatpush1.xpose.msra.mxu0 0.0
    %227 = vmatprep.mubr.f32.mxu0 0.0
    %228 = vmatmul.mubr.f32.gmra.mrb[0].mxu0 %v68
    %v229 = vpop.f32.mrb[0].mxu0
    %v230 = vadd.f32 0.0, %v229
    %v231 = vpop.f32.mrb[0].mxu0
    %232 = vmatprep.mubr.f32.mxu0 0.0
    %233 = vmatmul.mubr.f32.gmra.mrb[0].mxu0 %v71
    %v234 = vpop.f32.mrb[0].mxu0
    %v235 = vadd.f32 0.0, %v234
    %v236 = vpop.f32.mrb[0].mxu0
    %237 = vmatprep.mubr.f32.mxu0 0.0
    %238 = vmatmul.mubr.f32.gmra.mrb[0].mxu0 %v74
    %v239 = vpop.f32.mrb[0].mxu0
    %v240 = vadd.f32 0.0, %v239
    %v241 = vpop.f32.mrb[0].mxu0
    %242 = vmatprep.mubr.f32.mxu0 0.0
    %243 = vmatmul.mubr.f32.gmra.mrb[0].mxu0 %v77
    %v244 = vpop.f32.mrb[0].mxu0
    %v245 = vadd.f32 0.0, %v244
    %v246 = vpop.f32.mrb[0].mxu0
    %247 = vmatprep.mubr.f32.mxu0 0.0
    %248 = vmatmul.mubr.f32.gmra.mrb[0].mxu0 %v80
    %v249 = vpop.f32.mrb[0].mxu0
    %v250 = vadd.f32 0.0, %v249
    %v251 = vpop.f32.mrb[0].mxu0
    %252 = vmatprep.mubr.f32.mxu0 0.0
    %253 = vmatmul.mubr.f32.gmra.mrb[0].mxu0 %v83
    %v254 = vpop.f32.mrb[0].mxu0
    %v255 = vadd.f32 0.0, %v254
    %v256 = vpop.f32.mrb[0].mxu0
    %257 = vmatprep.mubr.f32.mxu0 0.0
    %258 = vmatmul.mubr.f32.gmra.mrb[0].mxu0 %v86
    %v259 = vpop.f32.mrb[0].mxu0
    %v260 = vadd.f32 0.0, %v259
    %v261 = vpop.f32.mrb[0].mxu0
    %262 = vmatprep.mubr.f32.mxu0 0.0
    %263 = vmatmul.mubr.f32.gmra.mrb[0].mxu0 %v89
    %v264 = vpop.f32.mrb[0].mxu0
    %v265 = vadd.f32 0.0, %v264
    %v266 = vpop.f32.mrb[0].mxu0
    %267 = vmatprep.mubr.f32.mxu0 0.0
    %268 = vmatmul.mubr.f32.gmra.mrb[0].mxu0 %v92
    %v269 = vpop.f32.mrb[0].mxu0
    %v270 = vadd.f32 0.0, %v269
    %v271 = vpop.f32.mrb[0].mxu0
    %272 = vmatprep.mubr.f32.mxu0 0.0
    %273 = vmatmul.mubr.f32.gmra.mrb[0].mxu0 %v95
    %v274 = vpop.f32.mrb[0].mxu0
    %v275 = vadd.f32 0.0, %v274
    %v276 = vpop.f32.mrb[0].mxu0
    %277 = vmatprep.mubr.f32.mxu0 0.0
    %278 = vmatmul.mubr.f32.gmra.mrb[0].mxu0 %v98
    %v279 = vpop.f32.mrb[0].mxu0
    %v280 = vadd.f32 0.0, %v279
    %v281 = vpop.f32.mrb[0].mxu0
    %282 = vmatprep.mubr.f32.mxu0 0.0
    %283 = vmatmul.mubr.f32.gmra.mrb[0].mxu0 %v101
    %v284 = vpop.f32.mrb[0].mxu0
    %v285 = vadd.f32 0.0, %v284
    %v286 = vpop.f32.mrb[0].mxu0
    %287 = vmatprep.mubr.f32.mxu0 0.0
    %288 = vmatmul.mubr.f32.gmra.mrb[0].mxu0 %v104
    %v289 = vpop.f32.mrb[0].mxu0
    %v290 = vadd.f32 0.0, %v289
    %v291 = vpop.f32.mrb[0].mxu0
    %292 = vmatprep.mubr.f32.mxu0 0.0
    %293 = vmatmul.mubr.f32.gmra.mrb[0].mxu0 %v107
    %v294 = vpop.f32.mrb[0].mxu0
    %v295 = vadd.f32 0.0, %v294
    %v296 = vpop.f32.mrb[0].mxu0
    %297 = vmatprep.mubr.f32.mxu0 0.0
    %298 = vmatmul.mubr.f32.gmra.mrb[0].mxu0 %v110
    %v299 = vpop.f32.mrb[0].mxu0
    %v300 = vadd.f32 0.0, %v299
    %v301 = vpop.f32.mrb[0].mxu0
    %302 = vmatprep.mubr.f32.mxu0 0.0
    %303 = vmatmul.mubr.f32.gmra.mrb[0].mxu0 %v113
    %v304 = vpop.f32.mrb[0].mxu0
    %v305 = vadd.f32 0.0, %v304
    %v306 = vpop.f32.mrb[0].mxu0
    %307 = vdwg.mxu0
    %v308 = vld [vmem:[%s3] sm:$0xff]
    %v309 = vld [vmem:[%s3 + $0x8] sm:$0xff]
    %v310 = vld [vmem:[%s3 + $0x10] sm:$0xff]
    %v311 = vld [vmem:[%s3 + $0x18] sm:$0xff]
    %v312 = vld [vmem:[%s3 + $0x20] sm:$0xff]
    %v313 = vld [vmem:[%s3 + $0x28] sm:$0xff]
    %v314 = vld [vmem:[%s3 + $0x30] sm:$0xff]
    %v315 = vld [vmem:[%s3 + $0x38] sm:$0xff]
    %v316 = vld [vmem:[%s3 + $0x40] sm:$0xff]
    %v317 = vld [vmem:[%s3 + $0x48] sm:$0xff]
    %v318 = vld [vmem:[%s3 + $0x50] sm:$0xff]
    %v319 = vld [vmem:[%s3 + $0x58] sm:$0xff]
    %v320 = vld [vmem:[%s3 + $0x60] sm:$0xff]
    %v321 = vld [vmem:[%s3 + $0x68] sm:$0xff]
    %v322 = vld [vmem:[%s3 + $0x70] sm:$0xff]
    %v323 = vld [vmem:[%s3 + $0x78] sm:$0xff]
    %v324 = vld [vmem:[%s4] sm:$0x1]
    %326 = vset.pattern.permute.xlu0 0
    %327 = vperm.xlu0 %326, %v308
    %v328 = vpop.permute.xlu0 %327
    %331 = vset.pattern.permute.xlu0 0
    %332 = vperm.xlu0 %331, %v309
    %v333 = vpop.permute.xlu0 %332
    %336 = vset.pattern.permute.xlu0 0
    %337 = vperm.xlu0 %336, %v310
    %v338 = vpop.permute.xlu0 %337
    %341 = vset.pattern.permute.xlu0 0
    %342 = vperm.xlu0 %341, %v311
    %v343 = vpop.permute.xlu0 %342
    %346 = vset.pattern.permute.xlu0 0
    %347 = vperm.xlu0 %346, %v312
    %v348 = vpop.permute.xlu0 %347
    %351 = vset.pattern.permute.xlu0 0
    %352 = vperm.xlu0 %351, %v313
    %v353 = vpop.permute.xlu0 %352
    %356 = vset.pattern.permute.xlu0 0
    %357 = vperm.xlu0 %356, %v314
    %v358 = vpop.permute.xlu0 %357
    %361 = vset.pattern.permute.xlu0 0
    %362 = vperm.xlu0 %361, %v315
    %v363 = vpop.permute.xlu0 %362
    %366 = vset.pattern.permute.xlu0 0
    %367 = vperm.xlu0 %366, %v316
    %v368 = vpop.permute.xlu0 %367
    %371 = vset.pattern.permute.xlu0 0
    %372 = vperm.xlu0 %371, %v317
    %v373 = vpop.permute.xlu0 %372
    %376 = vset.pattern.permute.xlu0 0
    %377 = vperm.xlu0 %376, %v318
    %v378 = vpop.permute.xlu0 %377
    %381 = vset.pattern.permute.xlu0 0
    %382 = vperm.xlu0 %381, %v319
    %v383 = vpop.permute.xlu0 %382
    %386 = vset.pattern.permute.xlu0 0
    %387 = vperm.xlu0 %386, %v320
    %v388 = vpop.permute.xlu0 %387
    %391 = vset.pattern.permute.xlu0 0
    %392 = vperm.xlu0 %391, %v321
    %v393 = vpop.permute.xlu0 %392
    %396 = vset.pattern.permute.xlu0 0
    %397 = vperm.xlu0 %396, %v322
    %v398 = vpop.permute.xlu0 %397
    %401 = vset.pattern.permute.xlu0 0
    %402 = vperm.xlu0 %401, %v323
    %v403 = vpop.permute.xlu0 %402
    %v406 = vlaneseq
    %v407 = vshrl.u32 %v406, 7
    %v408 = vsub.s32 0, %v407
    %v409 = vrot.slane %v324, %v408
    %v411 = vadd.f32 %v328, %v409
    %v412 = vadd.f32 %v333, %v409
    %v413 = vadd.f32 %v338, %v409
    %v414 = vadd.f32 %v343, %v409
    %v415 = vadd.f32 %v348, %v409
    %v416 = vadd.f32 %v353, %v409
    %v417 = vadd.f32 %v358, %v409
    %v418 = vadd.f32 %v363, %v409
    %v419 = vadd.f32 %v368, %v409
    %v420 = vadd.f32 %v373, %v409
    %v421 = vadd.f32 %v378, %v409
    %v422 = vadd.f32 %v383, %v409
    %v423 = vadd.f32 %v388, %v409
    %v424 = vadd.f32 %v393, %v409
    %v425 = vadd.f32 %v398, %v409
    %v426 = vadd.f32 %v403, %v409
    %v427 = vmul.f32 %v230, 2.0
    %v428 = vmul.f32 %v235, 2.0
    %v429 = vmul.f32 %v240, 2.0
    %v430 = vmul.f32 %v245, 2.0
    %v431 = vmul.f32 %v250, 2.0
    %v432 = vmul.f32 %v255, 2.0
    %v433 = vmul.f32 %v260, 2.0
    %v434 = vmul.f32 %v265, 2.0
    %v435 = vmul.f32 %v270, 2.0
    %v436 = vmul.f32 %v275, 2.0
    %v437 = vmul.f32 %v280, 2.0
    %v438 = vmul.f32 %v285, 2.0
    %v439 = vmul.f32 %v290, 2.0
    %v440 = vmul.f32 %v295, 2.0
    %v441 = vmul.f32 %v300, 2.0
    %v442 = vmul.f32 %v305, 2.0
    %v443 = vsub.f32 %v411, %v427
    %v444 = vsub.f32 %v412, %v428
    %v445 = vsub.f32 %v413, %v429
    %v446 = vsub.f32 %v414, %v430
    %v447 = vsub.f32 %v415, %v431
    %v448 = vsub.f32 %v416, %v432
    %v449 = vsub.f32 %v417, %v433
    %v450 = vsub.f32 %v418, %v434
    %v451 = vsub.f32 %v419, %v435
    %v452 = vsub.f32 %v420, %v436
    %v453 = vsub.f32 %v421, %v437
    %v454 = vsub.f32 %v422, %v438
    %v455 = vsub.f32 %v423, %v439
    %v456 = vsub.f32 %v424, %v440
    %v457 = vsub.f32 %v425, %v441
    %v458 = vsub.f32 %v426, %v442
    %v459 = vmax.f32 %v443, 0.0
    %v460 = vmax.f32 %v444, 0.0
    %v461 = vmax.f32 %v445, 0.0
    %v462 = vmax.f32 %v446, 0.0
    %v463 = vmax.f32 %v447, 0.0
    %v464 = vmax.f32 %v448, 0.0
    %v465 = vmax.f32 %v449, 0.0
    %v466 = vmax.f32 %v450, 0.0
    %v467 = vmax.f32 %v451, 0.0
    %v468 = vmax.f32 %v452, 0.0
    %v469 = vmax.f32 %v453, 0.0
    %v470 = vmax.f32 %v454, 0.0
    %v471 = vmax.f32 %v455, 0.0
    %v472 = vmax.f32 %v456, 0.0
    %v473 = vmax.f32 %v457, 0.0
    %v474 = vmax.f32 %v458, 0.0
    %s475 = sld [smem:[#allocation2 + $0x2]]
    %v476 = vstv %s475
    %v477 = vmul.f32 %v459, %v476
    %v478 = vmul.f32 %v460, %v476
    %v479 = vmul.f32 %v461, %v476
    %v480 = vmul.f32 %v462, %v476
    %v481 = vmul.f32 %v463, %v476
    %v482 = vmul.f32 %v464, %v476
    %v483 = vmul.f32 %v465, %v476
    %v484 = vmul.f32 %v466, %v476
    %v485 = vmul.f32 %v467, %v476
    %v486 = vmul.f32 %v468, %v476
    %v487 = vmul.f32 %v469, %v476
    %v488 = vmul.f32 %v470, %v476
    %v489 = vmul.f32 %v471, %v476
    %v490 = vmul.f32 %v472, %v476
    %v491 = vmul.f32 %v473, %v476
    %v492 = vmul.f32 %v474, %v476
    %v493 = vmul.f32 %v477, 1.442695
    %v494 = vpow.pop %v493
    %v495 = vmul.f32 %v478, 1.442695
    %v496 = vpow.pop %v495
    %v497 = vmul.f32 %v479, 1.442695
    %v498 = vpow.pop %v497
    %v499 = vmul.f32 %v480, 1.442695
    %v500 = vpow.pop %v499
    %v501 = vmul.f32 %v481, 1.442695
    %v502 = vpow.pop %v501
    %v503 = vmul.f32 %v482, 1.442695
    %v504 = vpow.pop %v503
    %v505 = vmul.f32 %v483, 1.442695
    %v506 = vpow.pop %v505
    %v507 = vmul.f32 %v484, 1.442695
    %v508 = vpow.pop %v507
    %v509 = vmul.f32 %v485, 1.442695
    %v510 = vpow.pop %v509
    %v511 = vmul.f32 %v486, 1.442695
    %v512 = vpow.pop %v511
    %v513 = vmul.f32 %v487, 1.442695
    %v514 = vpow.pop %v513
    %v515 = vmul.f32 %v488, 1.442695
    %v516 = vpow.pop %v515
    %v517 = vmul.f32 %v489, 1.442695
    %v518 = vpow.pop %v517
    %v519 = vmul.f32 %v490, 1.442695
    %v520 = vpow.pop %v519
    %v521 = vmul.f32 %v491, 1.442695
    %v522 = vpow.pop %v521
    %v523 = vmul.f32 %v492, 1.442695
    %v524 = vpow.pop %v523
    %v525 = vmul.f32 %v494, %v494
    %v526 = vmul.f32 %v496, %v496
    %v527 = vmul.f32 %v498, %v498
    %v528 = vmul.f32 %v500, %v500
    %v529 = vmul.f32 %v502, %v502
    %v530 = vmul.f32 %v504, %v504
    %v531 = vmul.f32 %v506, %v506
    %v532 = vmul.f32 %v508, %v508
    %v533 = vmul.f32 %v510, %v510
    %v534 = vmul.f32 %v512, %v512
    %v535 = vmul.f32 %v514, %v514
    %v536 = vmul.f32 %v516, %v516
    %v537 = vmul.f32 %v518, %v518
    %v538 = vmul.f32 %v520, %v520
    %v539 = vmul.f32 %v522, %v522
    %v540 = vmul.f32 %v524, %v524
    %v541 = vadd.f32 %v494, %v525
    %v542 = vadd.f32 %v496, %v526
    %v543 = vadd.f32 %v498, %v527
    %v544 = vadd.f32 %v500, %v528
    %v545 = vadd.f32 %v502, %v529
    %v546 = vadd.f32 %v504, %v530
    %v547 = vadd.f32 %v506, %v531
    %v548 = vadd.f32 %v508, %v532
    %v549 = vadd.f32 %v510, %v533
    %v550 = vadd.f32 %v512, %v534
    %v551 = vadd.f32 %v514, %v535
    %v552 = vadd.f32 %v516, %v536
    %v553 = vadd.f32 %v518, %v537
    %v554 = vadd.f32 %v520, %v538
    %v555 = vadd.f32 %v522, %v539
    %v556 = vadd.f32 %v524, %v540
    %v557 = vmul.f32 %v525, %v525
    %v558 = vmul.f32 %v526, %v526
    %v559 = vmul.f32 %v527, %v527
    %v560 = vmul.f32 %v528, %v528
    %v561 = vmul.f32 %v529, %v529
    %v562 = vmul.f32 %v530, %v530
    %v563 = vmul.f32 %v531, %v531
    %v564 = vmul.f32 %v532, %v532
    %v565 = vmul.f32 %v533, %v533
    %v566 = vmul.f32 %v534, %v534
    %v567 = vmul.f32 %v535, %v535
    %v568 = vmul.f32 %v536, %v536
    %v569 = vmul.f32 %v537, %v537
    %v570 = vmul.f32 %v538, %v538
    %v571 = vmul.f32 %v539, %v539
    %v572 = vmul.f32 %v540, %v540
    %v573 = vadd.f32 %v541, %v557
    %v574 = vadd.f32 %v542, %v558
    %v575 = vadd.f32 %v543, %v559
    %v576 = vadd.f32 %v544, %v560
    %v577 = vadd.f32 %v545, %v561
    %v578 = vadd.f32 %v546, %v562
    %v579 = vadd.f32 %v547, %v563
    %v580 = vadd.f32 %v548, %v564
    %v581 = vadd.f32 %v549, %v565
    %v582 = vadd.f32 %v550, %v566
    %v583 = vadd.f32 %v551, %v567
    %v584 = vadd.f32 %v552, %v568
    %v585 = vadd.f32 %v553, %v569
    %v586 = vadd.f32 %v554, %v570
    %v587 = vadd.f32 %v555, %v571
    %v588 = vadd.f32 %v556, %v572
    %v589 = vrsqrt.pop %v494
    %v590 = vmul.f32 %v494, %v589
    %vm591 = vcmp.eq.f32.partialorder %v494, inf
    %v592 = vsel %vm591, %v494, %v590
    %vm593 = vcmp.eq.f32.partialorder %v494, 0.0
    %v594 = vand.u32 %v494, 2147483648
    %v595 = vsel %vm593, %v594, %v592
    %v596 = vrsqrt.pop %v496
    %v597 = vmul.f32 %v496, %v596
    %vm598 = vcmp.eq.f32.partialorder %v496, inf
    %v599 = vsel %vm598, %v496, %v597
    %vm600 = vcmp.eq.f32.partialorder %v496, 0.0
    %v601 = vand.u32 %v496, 2147483648
    %v602 = vsel %vm600, %v601, %v599
    %v603 = vrsqrt.pop %v498
    %v604 = vmul.f32 %v498, %v603
    %vm605 = vcmp.eq.f32.partialorder %v498, inf
    %v606 = vsel %vm605, %v498, %v604
    %vm607 = vcmp.eq.f32.partialorder %v498, 0.0
    %v608 = vand.u32 %v498, 2147483648
    %v609 = vsel %vm607, %v608, %v606
    %v610 = vrsqrt.pop %v500
    %v611 = vmul.f32 %v500, %v610
    %vm612 = vcmp.eq.f32.partialorder %v500, inf
    %v613 = vsel %vm612, %v500, %v611
    %vm614 = vcmp.eq.f32.partialorder %v500, 0.0
    %v615 = vand.u32 %v500, 2147483648
    %v616 = vsel %vm614, %v615, %v613
    %v617 = vrsqrt.pop %v502
    %v618 = vmul.f32 %v502, %v617
    %vm619 = vcmp.eq.f32.partialorder %v502, inf
    %v620 = vsel %vm619, %v502, %v618
    %vm621 = vcmp.eq.f32.partialorder %v502, 0.0
    %v622 = vand.u32 %v502, 2147483648
    %v623 = vsel %vm621, %v622, %v620
    %v624 = vrsqrt.pop %v504
    %v625 = vmul.f32 %v504, %v624
    %vm626 = vcmp.eq.f32.partialorder %v504, inf
    %v627 = vsel %vm626, %v504, %v625
    %vm628 = vcmp.eq.f32.partialorder %v504, 0.0
    %v629 = vand.u32 %v504, 2147483648
    %v630 = vsel %vm628, %v629, %v627
    %v631 = vrsqrt.pop %v506
    %v632 = vmul.f32 %v506, %v631
    %vm633 = vcmp.eq.f32.partialorder %v506, inf
    %v634 = vsel %vm633, %v506, %v632
    %vm635 = vcmp.eq.f32.partialorder %v506, 0.0
    %v636 = vand.u32 %v506, 2147483648
    %v637 = vsel %vm635, %v636, %v634
    %v638 = vrsqrt.pop %v508
    %v639 = vmul.f32 %v508, %v638
    %vm640 = vcmp.eq.f32.partialorder %v508, inf
    %v641 = vsel %vm640, %v508, %v639
    %vm642 = vcmp.eq.f32.partialorder %v508, 0.0
    %v643 = vand.u32 %v508, 2147483648
    %v644 = vsel %vm642, %v643, %v641
    %v645 = vrsqrt.pop %v510
    %v646 = vmul.f32 %v510, %v645
    %vm647 = vcmp.eq.f32.partialorder %v510, inf
    %v648 = vsel %vm647, %v510, %v646
    %vm649 = vcmp.eq.f32.partialorder %v510, 0.0
    %v650 = vand.u32 %v510, 2147483648
    %v651 = vsel %vm649, %v650, %v648
    %v652 = vrsqrt.pop %v512
    %v653 = vmul.f32 %v512, %v652
    %vm654 = vcmp.eq.f32.partialorder %v512, inf
    %v655 = vsel %vm654, %v512, %v653
    %vm656 = vcmp.eq.f32.partialorder %v512, 0.0
    %v657 = vand.u32 %v512, 2147483648
    %v658 = vsel %vm656, %v657, %v655
    %v659 = vrsqrt.pop %v514
    %v660 = vmul.f32 %v514, %v659
    %vm661 = vcmp.eq.f32.partialorder %v514, inf
    %v662 = vsel %vm661, %v514, %v660
    %vm663 = vcmp.eq.f32.partialorder %v514, 0.0
    %v664 = vand.u32 %v514, 2147483648
    %v665 = vsel %vm663, %v664, %v662
    %v666 = vrsqrt.pop %v516
    %v667 = vmul.f32 %v516, %v666
    %vm668 = vcmp.eq.f32.partialorder %v516, inf
    %v669 = vsel %vm668, %v516, %v667
    %vm670 = vcmp.eq.f32.partialorder %v516, 0.0
    %v671 = vand.u32 %v516, 2147483648
    %v672 = vsel %vm670, %v671, %v669
    %v673 = vrsqrt.pop %v518
    %v674 = vmul.f32 %v518, %v673
    %vm675 = vcmp.eq.f32.partialorder %v518, inf
    %v676 = vsel %vm675, %v518, %v674
    %vm677 = vcmp.eq.f32.partialorder %v518, 0.0
    %v678 = vand.u32 %v518, 2147483648
    %v679 = vsel %vm677, %v678, %v676
    %v680 = vrsqrt.pop %v520
    %v681 = vmul.f32 %v520, %v680
    %vm682 = vcmp.eq.f32.partialorder %v520, inf
    %v683 = vsel %vm682, %v520, %v681
    %vm684 = vcmp.eq.f32.partialorder %v520, 0.0
    %v685 = vand.u32 %v520, 2147483648
    %v686 = vsel %vm684, %v685, %v683
    %v687 = vrsqrt.pop %v522
    %v688 = vmul.f32 %v522, %v687
    %vm689 = vcmp.eq.f32.partialorder %v522, inf
    %v690 = vsel %vm689, %v522, %v688
    %vm691 = vcmp.eq.f32.partialorder %v522, 0.0
    %v692 = vand.u32 %v522, 2147483648
    %v693 = vsel %vm691, %v692, %v690
    %v694 = vrsqrt.pop %v524
    %v695 = vmul.f32 %v524, %v694
    %vm696 = vcmp.eq.f32.partialorder %v524, inf
    %v697 = vsel %vm696, %v524, %v695
    %vm698 = vcmp.eq.f32.partialorder %v524, 0.0
    %v699 = vand.u32 %v524, 2147483648
    %v700 = vsel %vm698, %v699, %v697
    %v701 = vadd.f32 %v573, %v595
    %v702 = vadd.f32 %v574, %v602
    %v703 = vadd.f32 %v575, %v609
    %v704 = vadd.f32 %v576, %v616
    %v705 = vadd.f32 %v577, %v623
    %v706 = vadd.f32 %v578, %v630
    %v707 = vadd.f32 %v579, %v637
    %v708 = vadd.f32 %v580, %v644
    %v709 = vadd.f32 %v581, %v651
    %v710 = vadd.f32 %v582, %v658
    %v711 = vadd.f32 %v583, %v665
    %v712 = vadd.f32 %v584, %v672
    %v713 = vadd.f32 %v585, %v679
    %v714 = vadd.f32 %v586, %v686
    %v715 = vadd.f32 %v587, %v693
    %v716 = vadd.f32 %v588, %v700
    %v717 = vrsqrt.pop %v595
    %v718 = vmul.f32 %v595, %v717
    %vm719 = vcmp.eq.f32.partialorder %v595, inf
    %v720 = vsel %vm719, %v595, %v718
    %vm721 = vcmp.eq.f32.partialorder %v595, 0.0
    %v722 = vand.u32 %v595, 2147483648
    %v723 = vsel %vm721, %v722, %v720
    %v724 = vrsqrt.pop %v602
    %v725 = vmul.f32 %v602, %v724
    %vm726 = vcmp.eq.f32.partialorder %v602, inf
    %v727 = vsel %vm726, %v602, %v725
    %vm728 = vcmp.eq.f32.partialorder %v602, 0.0
    %v729 = vand.u32 %v602, 2147483648
    %v730 = vsel %vm728, %v729, %v727
    %v731 = vrsqrt.pop %v609
    %v732 = vmul.f32 %v609, %v731
    %vm733 = vcmp.eq.f32.partialorder %v609, inf
    %v734 = vsel %vm733, %v609, %v732
    %vm735 = vcmp.eq.f32.partialorder %v609, 0.0
    %v736 = vand.u32 %v609, 2147483648
    %v737 = vsel %vm735, %v736, %v734
    %v738 = vrsqrt.pop %v616
    %v739 = vmul.f32 %v616, %v738
    %vm740 = vcmp.eq.f32.partialorder %v616, inf
    %v741 = vsel %vm740, %v616, %v739
    %vm742 = vcmp.eq.f32.partialorder %v616, 0.0
    %v743 = vand.u32 %v616, 2147483648
    %v744 = vsel %vm742, %v743, %v741
    %v745 = vrsqrt.pop %v623
    %v746 = vmul.f32 %v623, %v745
    %vm747 = vcmp.eq.f32.partialorder %v623, inf
    %v748 = vsel %vm747, %v623, %v746
    %vm749 = vcmp.eq.f32.partialorder %v623, 0.0
    %v750 = vand.u32 %v623, 2147483648
    %v751 = vsel %vm749, %v750, %v748
    %v752 = vrsqrt.pop %v630
    %v753 = vmul.f32 %v630, %v752
    %vm754 = vcmp.eq.f32.partialorder %v630, inf
    %v755 = vsel %vm754, %v630, %v753
    %vm756 = vcmp.eq.f32.partialorder %v630, 0.0
    %v757 = vand.u32 %v630, 2147483648
    %v758 = vsel %vm756, %v757, %v755
    %v759 = vrsqrt.pop %v637
    %v760 = vmul.f32 %v637, %v759
    %vm761 = vcmp.eq.f32.partialorder %v637, inf
    %v762 = vsel %vm761, %v637, %v760
    %vm763 = vcmp.eq.f32.partialorder %v637, 0.0
    %v764 = vand.u32 %v637, 2147483648
    %v765 = vsel %vm763, %v764, %v762
    %v766 = vrsqrt.pop %v644
    %v767 = vmul.f32 %v644, %v766
    %vm768 = vcmp.eq.f32.partialorder %v644, inf
    %v769 = vsel %vm768, %v644, %v767
    %vm770 = vcmp.eq.f32.partialorder %v644, 0.0
    %v771 = vand.u32 %v644, 2147483648
    %v772 = vsel %vm770, %v771, %v769
    %v773 = vrsqrt.pop %v651
    %v774 = vmul.f32 %v651, %v773
    %vm775 = vcmp.eq.f32.partialorder %v651, inf
    %v776 = vsel %vm775, %v651, %v774
    %vm777 = vcmp.eq.f32.partialorder %v651, 0.0
    %v778 = vand.u32 %v651, 2147483648
    %v779 = vsel %vm777, %v778, %v776
    %v780 = vrsqrt.pop %v658
    %v781 = vmul.f32 %v658, %v780
    %vm782 = vcmp.eq.f32.partialorder %v658, inf
    %v783 = vsel %vm782, %v658, %v781
    %vm784 = vcmp.eq.f32.partialorder %v658, 0.0
    %v785 = vand.u32 %v658, 2147483648
    %v786 = vsel %vm784, %v785, %v783
    %v787 = vrsqrt.pop %v665
    %v788 = vmul.f32 %v665, %v787
    %vm789 = vcmp.eq.f32.partialorder %v665, inf
    %v790 = vsel %vm789, %v665, %v788
    %vm791 = vcmp.eq.f32.partialorder %v665, 0.0
    %v792 = vand.u32 %v665, 2147483648
    %v793 = vsel %vm791, %v792, %v790
    %v794 = vrsqrt.pop %v672
    %v795 = vmul.f32 %v672, %v794
    %vm796 = vcmp.eq.f32.partialorder %v672, inf
    %v797 = vsel %vm796, %v672, %v795
    %vm798 = vcmp.eq.f32.partialorder %v672, 0.0
    %v799 = vand.u32 %v672, 2147483648
    %v800 = vsel %vm798, %v799, %v797
    %v801 = vrsqrt.pop %v679
    %v802 = vmul.f32 %v679, %v801
    %vm803 = vcmp.eq.f32.partialorder %v679, inf
    %v804 = vsel %vm803, %v679, %v802
    %vm805 = vcmp.eq.f32.partialorder %v679, 0.0
    %v806 = vand.u32 %v679, 2147483648
    %v807 = vsel %vm805, %v806, %v804
    %v808 = vrsqrt.pop %v686
    %v809 = vmul.f32 %v686, %v808
    %vm810 = vcmp.eq.f32.partialorder %v686, inf
    %v811 = vsel %vm810, %v686, %v809
    %vm812 = vcmp.eq.f32.partialorder %v686, 0.0
    %v813 = vand.u32 %v686, 2147483648
    %v814 = vsel %vm812, %v813, %v811
    %v815 = vrsqrt.pop %v693
    %v816 = vmul.f32 %v693, %v815
    %vm817 = vcmp.eq.f32.partialorder %v693, inf
    %v818 = vsel %vm817, %v693, %v816
    %vm819 = vcmp.eq.f32.partialorder %v693, 0.0
    %v820 = vand.u32 %v693, 2147483648
    %v821 = vsel %vm819, %v820, %v818
    %v822 = vrsqrt.pop %v700
    %v823 = vmul.f32 %v700, %v822
    %vm824 = vcmp.eq.f32.partialorder %v700, inf
    %v825 = vsel %vm824, %v700, %v823
    %vm826 = vcmp.eq.f32.partialorder %v700, 0.0
    %v827 = vand.u32 %v700, 2147483648
    %v828 = vsel %vm826, %v827, %v825
    %v829 = vadd.f32 %v701, %v723
    %v830 = vadd.f32 %v702, %v730
    %v831 = vadd.f32 %v703, %v737
    %v832 = vadd.f32 %v704, %v744
    %v833 = vadd.f32 %v705, %v751
    %v834 = vadd.f32 %v706, %v758
    %v835 = vadd.f32 %v707, %v765
    %v836 = vadd.f32 %v708, %v772
    %v837 = vadd.f32 %v709, %v779
    %v838 = vadd.f32 %v710, %v786
    %v839 = vadd.f32 %v711, %v793
    %v840 = vadd.f32 %v712, %v800
    %v841 = vadd.f32 %v713, %v807
    %v842 = vadd.f32 %v714, %v814
    %v843 = vadd.f32 %v715, %v821
    %v844 = vadd.f32 %v716, %v828
    %845 = vst [vmem:[#allocation5] sm:$0xff] %v829
    %846 = vst [vmem:[#allocation5 + $0x8] sm:$0xff] %v830
    %847 = vst [vmem:[#allocation5 + $0x10] sm:$0xff] %v831
    %848 = vst [vmem:[#allocation5 + $0x18] sm:$0xff] %v832
    %849 = vst [vmem:[#allocation5 + $0x20] sm:$0xff] %v833
    %850 = vst [vmem:[#allocation5 + $0x28] sm:$0xff] %v834
    %851 = vst [vmem:[#allocation5 + $0x30] sm:$0xff] %v835
    %852 = vst [vmem:[#allocation5 + $0x38] sm:$0xff] %v836
    %853 = vst [vmem:[#allocation5 + $0x40] sm:$0xff] %v837
    %854 = vst [vmem:[#allocation5 + $0x48] sm:$0xff] %v838
    %855 = vst [vmem:[#allocation5 + $0x50] sm:$0xff] %v839
    %856 = vst [vmem:[#allocation5 + $0x58] sm:$0xff] %v840
    %857 = vst [vmem:[#allocation5 + $0x60] sm:$0xff] %v841
    %858 = vst [vmem:[#allocation5 + $0x68] sm:$0xff] %v842
    %859 = vst [vmem:[#allocation5 + $0x70] sm:$0xff] %v843
    %860 = vst [vmem:[#allocation5 + $0x78] sm:$0xff] %v844
    // Predicated region
    $region26: #{tpu_custom_call.1} parent=1 // pred_check
      _
    $region27: #{tpu_custom_call.1} parent=1 // pred_check_branch
      %862 = sbr.rel (0) target = $region29
    $region28: #{tpu_custom_call.1} parent=1 // pred_region
      %s864 = ssub.s32 2048, 2048
      %865 = vsyncadd [#allocation3], %s864
      %s866 = sshll.u32 [#allocation5], 4
      %s867 = int_to_ptr.vmem [resolvable:$true] %s866
      %872 = dma.vmem_to_hbm [thread:$0]  %s867, 2048, %s5, [#allocation3], 128, 128, 8
    $region29: #{tpu_custom_call.1} parent=1 // pred_fallthru
      _
    // Predicated region
    $region30: #{tpu_custom_call.1} parent=1 // pred_check
      _
    $region31: #{tpu_custom_call.1} parent=1 // pred_check_branch
      %874 = sbr.rel (0) target = $region33
    $region32: #{tpu_custom_call.1} parent=1 // pred_region
      %875 = dma.done [#allocation3], 2048
    $region33: #{tpu_custom_call.1} parent=1 // pred_fallthru
      _
    %876 = vsyncpa [#allocation3], 1
    %877 = vsyncpa [#allocation4], 1

</llo_original>
